<compile_context>
chip_gen: v5e
topology: v5e:2x2
jax: 0.10.0
libtpu: 0.0.40
codegen_flags: <defaults>
</compile_context>

<pallas_src>
import jax
import jax.numpy as jnp
from jax.experimental import pallas as pl
from jax.experimental.pallas import tpu as pltpu

HIDDEN = 128


def mlp_kernel(x_ref, w1_ref, b1_ref, w2_ref, b2_ref, w3_ref, b3_ref, o_ref):
    # Cast x to the MXU operand dtype inside the kernel (VPU work, hidden
    # under MXU/DMA); accumulate in f32.
    x = x_ref[...].astype(w1_ref.dtype)
    # Layer 1: Linear + ReLU
    h1 = jnp.dot(x, w1_ref[...], preferred_element_type=jnp.float32)
    h1 = jnp.maximum(h1 + b1_ref[...], 0.0)
    # Layer 2: Linear + ReLU
    h2 = jnp.dot(h1.astype(w2_ref.dtype), w2_ref[...],
                 preferred_element_type=jnp.float32)
    h2 = jnp.maximum(h2 + b2_ref[...], 0.0)
    # Layer 3: Linear (no activation); output block is (bt, out_dim)
    out = jnp.dot(h2.astype(w3_ref.dtype), w3_ref[...],
                  preferred_element_type=jnp.float32)
    o_ref[...] = (out + b3_ref[...]).astype(o_ref.dtype)


def _round_up(n, m):
    return ((n + m - 1) // m) * m


def _num_tensorcores():
    """Best-effort TensorCore count (v7x megacore => 2); defaults to 1."""
    try:
        kind = jax.devices()[0].device_kind.lower()
        return 2 if "v7" in kind else 1
    except Exception:  # pragma: no cover - detection is purely advisory
        return 1


def _pick_batch_tile(B, in_dim, out_dim, w_dtype, out_dtype,
                     budget_bytes=12 * 1024 * 1024, max_tile=8192):
    """Largest batch tile that keeps the per-step working set under budget."""
    wb = jnp.dtype(w_dtype).itemsize
    ob = jnp.dtype(out_dtype).itemsize
    # Resident weights/biases (assume worst case: double-buffered).
    weight_bytes = 2 * ((in_dim * HIDDEN + HIDDEN * HIDDEN + HIDDEN * out_dim) * wb
                        + (2 * HIDDEN + out_dim) * 4)
    # Per batch-row footprint: double-buffered x (f32) and out tiles, plus the
    # in-kernel bf16 copy of x and the f32 + bf16 h1/h2 intermediates.
    per_row = (2 * in_dim * 4 + in_dim * wb
               + 2 * out_dim * ob
               + 2 * HIDDEN * (4 + wb))
    bt = (budget_bytes - weight_bytes) // per_row
    bt = min(bt, max_tile)

    n_tc = _num_tensorcores()
    if n_tc > 1:
        # v7x megacore: keep >= n_tc grid steps so the "parallel" batch axis
        # can be sharded across TensorCores.  Single-TC chips (v5e/v6e) skip
        # this -- there the grid is a serial loop and fewer steps is better.
        bt = min(bt, -(-B // n_tc))

    if bt >= B:
        bt = B                              # single step, no batch padding
    else:
        bt = max(256, (bt // 256) * 256)    # MXU-friendly M tile
    return max(8, _round_up(bt, 8))         # sublane multiple


def network_forward(x, params, *, use_bf16=True, out_dtype=jnp.float32):
    """3-layer MLP forward pass as a single fused Pallas TPU kernel.

    x:      [B, in_dim] float32
    params: dict with w1 [in_dim,128], b1 [1,128], w2 [128,128], b2 [1,128],
            w3 [128,out_dim], b3 [1,out_dim]  (x @ W + b layout, W = W_torch.T)
    """
    w1, b1 = params["w1"], params["b1"]
    w2, b2 = params["w2"], params["b2"]
    w3, b3 = params["w3"], params["b3"]

    for name, b in (("b1", b1), ("b2", b2), ("b3", b3)):
        assert b.ndim == 2 and b.shape[0] == 1, f"{name} must have shape (1, N)"

    B, in_dim = x.shape
    out_dim = w3.shape[1]

    # ---- dtypes: weights pre-cast once (bf16 MXU operands), biases f32 ------
    mxu_dtype = jnp.bfloat16 if use_bf16 else jnp.float32
    w1k, w2k, w3k = (w.astype(mxu_dtype) for w in (w1, w2, w3))
    b1k, b2k, b3k = (b.astype(jnp.float32) for b in (b1, b2, b3))

    # ---- batch tile from VMEM budget; pad batch only if needed --------------
    bt = _pick_batch_tile(B, in_dim, out_dim, mxu_dtype, out_dtype)
    Bp = _round_up(B, bt)
    xk = x if Bp == B else jnp.pad(x, ((0, Bp - B), (0, 0)))

    grid = (Bp // bt,)

    # TODO(synk): for very large out_dim add a second (out-column) grid axis so
    # the (bt, out_dim) output tile and w3 column blocks stay VMEM-sized; the
    # VMEM budget above only shrinks bt, it does not tile N.

    def build(weight_spec):
        return pl.pallas_call(
            mlp_kernel,
            out_shape=jax.ShapeDtypeStruct((Bp, out_dim), out_dtype),
            grid_spec=pltpu.PrefetchScalarGridSpec(
                num_scalar_prefetch=0,
                grid=grid,
                in_specs=[
                    pl.BlockSpec((bt, in_dim), lambda i: (i, 0)),   # x tile
                    weight_spec(w1k), weight_spec(b1k),
                    weight_spec(w2k), weight_spec(b2k),
                    weight_spec(w3k), weight_spec(b3k),
                ],
                out_specs=pl.BlockSpec((bt, out_dim), lambda i: (i, 0)),
            ),
            compiler_params=pltpu.CompilerParams(
                dimension_semantics=("parallel",),
            ),
        )

    # Constant-index weights/biases: request a single VMEM buffer (they never
    # change across grid steps).  Fall back to the default double-buffered
    # spec if this Pallas build rejects buffer_count=1.
    single = lambda a: pl.BlockSpec(a.shape, lambda i: (0, 0),
                                    pipeline_mode=pl.Buffered(1))
    double = lambda a: pl.BlockSpec(a.shape, lambda i: (0, 0))
    try:
        out = build(single)(xk, w1k, b1k, w2k, b2k, w3k, b3k)
        out = jax.block_until_ready(out)
    except Exception:
        out = build(double)(xk, w1k, b1k, w2k, b2k, w3k, b3k)

    return out if Bp == B else out[:B]


def init_params(key, in_dim, out_dim):
    """PyTorch nn.Linear-style init: U[-1/sqrt(fan_in), 1/sqrt(fan_in)]."""
    ks = jax.random.split(key, 6)

    def linear(kw, kb, fan_in, fan_out):
        bound = 1.0 / jnp.sqrt(jnp.float32(fan_in))
        w = jax.random.uniform(kw, (fan_in, fan_out), jnp.float32, -bound, bound)
        b = jax.random.uniform(kb, (1, fan_out), jnp.float32, -bound, bound)
        return w, b

    w1, b1 = linear(ks[0], ks[1], in_dim, HIDDEN)
    w2, b2 = linear(ks[2], ks[3], HIDDEN, HIDDEN)
    w3, b3 = linear(ks[4], ks[5], HIDDEN, out_dim)
    return {"w1": w1, "b1": b1, "w2": w2, "b2": b2, "w3": w3, "b3": b3}


def reference_forward(x, p, *, use_bf16=True):
    """Pure-JAX reference with the same bf16-operand / f32-accum numerics."""
    dt = jnp.bfloat16 if use_bf16 else jnp.float32

    def lin(h, w, b):
        return jnp.dot(h.astype(dt), w.astype(dt),
                       preferred_element_type=jnp.float32) + b

    h1 = jnp.maximum(lin(x, p["w1"], p["b1"]), 0.0)
    h2 = jnp.maximum(lin(h1, p["w2"], p["b2"]), 0.0)
    return lin(h2, p["w3"], p["b3"])


if __name__ == "__main__":
    in_dim, out_dim = 8, 4
    batch = 16

    key = jax.random.PRNGKey(0)
    kx, kp = jax.random.split(key)
    x = jax.random.normal(kx, (batch, in_dim), jnp.float32)
    params = init_params(kp, in_dim, out_dim)

    out = network_forward(x, params)        # bt=16 (or 8 on megacore), unpadded output
    out = jax.block_until_ready(out)

    ref = reference_forward(x, params)
    assert out.shape == (batch, out_dim)
    assert jnp.allclose(out, ref, atol=1e-2, rtol=1e-2), "mismatch vs. reference"

    print("KERNEL_OK")
</pallas_src>

<mosaic_0001>
module attributes {stable_mosaic.version = 11 : i64} {
  func.func @mlp_kernel(%arg0: i32, %arg1: memref<16x8xf32, #tpu.memory_space<vmem>>, %arg2: memref<8x128xbf16, #tpu.memory_space<vmem>>, %arg3: memref<1x128xf32, #tpu.memory_space<vmem>>, %arg4: memref<128x128xbf16, #tpu.memory_space<vmem>>, %arg5: memref<1x128xf32, #tpu.memory_space<vmem>>, %arg6: memref<128x4xbf16, #tpu.memory_space<vmem>>, %arg7: memref<1x4xf32, #tpu.memory_space<vmem>>, %arg8: memref<16x4xf32, #tpu.memory_space<vmem>>) attributes {dimension_semantics = [#tpu.dimension_semantics<parallel>], iteration_bounds = array<i64: 1>, scalar_prefetch = 0 : i64, scratch_operands = 0 : i64, tpu.core_type = #tpu.core_type<tc>, window_params = [{transform_indices = @transform_0, window_bounds = array<i64: 16, 8>}, {pipeline_mode = #tpu.pipeline_mode<synchronous>, transform_indices = @transform_1, window_bounds = array<i64: 8, 128>}, {pipeline_mode = #tpu.pipeline_mode<synchronous>, transform_indices = @transform_2, window_bounds = array<i64: 1, 128>}, {pipeline_mode = #tpu.pipeline_mode<synchronous>, transform_indices = @transform_3, window_bounds = array<i64: 128, 128>}, {pipeline_mode = #tpu.pipeline_mode<synchronous>, transform_indices = @transform_4, window_bounds = array<i64: 1, 128>}, {pipeline_mode = #tpu.pipeline_mode<synchronous>, transform_indices = @transform_5, window_bounds = array<i64: 128, 4>}, {pipeline_mode = #tpu.pipeline_mode<synchronous>, transform_indices = @transform_6, window_bounds = array<i64: 1, 4>}, {transform_indices = @transform_7, window_bounds = array<i64: 16, 4>}]} {
    %c0 = arith.constant 0 : index
    %c0_0 = arith.constant 0 : index
    %0 = vector.load %arg1[%c0, %c0_0] : memref<16x8xf32, #tpu.memory_space<vmem>>, vector<16x8xf32>
    %1 = arith.truncf %0 : vector<16x8xf32> to vector<16x8xbf16>
    %c0_1 = arith.constant 0 : index
    %c0_2 = arith.constant 0 : index
    %2 = vector.load %arg2[%c0_1, %c0_2] : memref<8x128xbf16, #tpu.memory_space<vmem>>, vector<8x128xbf16>
    %cst = arith.constant dense<0.000000e+00> : vector<16x128xf32>
    %3 = tpu.matmul %1, %2, %cst {dimension_numbers = #tpu.dot_dimension_numbers<[1], [0], [0], [1], [0, 0, 1, 1], [], []>} : vector<16x8xbf16>, vector<8x128xbf16>, vector<16x128xf32> -> vector<16x128xf32>
    %c0_3 = arith.constant 0 : index
    %c0_4 = arith.constant 0 : index
    %4 = vector.load %arg3[%c0_3, %c0_4] : memref<1x128xf32, #tpu.memory_space<vmem>>, vector<1x128xf32>
    %5 = vector.broadcast %4 : vector<1x128xf32> to vector<16x128xf32>
    %6 = arith.addf %3, %5 : vector<16x128xf32>
    %cst_5 = arith.constant 0.000000e+00 : f32
    %7 = vector.broadcast %cst_5 : f32 to vector<16x128xf32>
    %8 = arith.maximumf %6, %7 : vector<16x128xf32>
    %9 = arith.truncf %8 : vector<16x128xf32> to vector<16x128xbf16>
    %c0_6 = arith.constant 0 : index
    %c0_7 = arith.constant 0 : index
    %10 = vector.load %arg4[%c0_6, %c0_7] : memref<128x128xbf16, #tpu.memory_space<vmem>>, vector<128x128xbf16>
    %cst_8 = arith.constant dense<0.000000e+00> : vector<16x128xf32>
    %11 = tpu.matmul %9, %10, %cst_8 {dimension_numbers = #tpu.dot_dimension_numbers<[1], [0], [0], [1], [0, 0, 1, 1], [], []>} : vector<16x128xbf16>, vector<128x128xbf16>, vector<16x128xf32> -> vector<16x128xf32>
    %c0_9 = arith.constant 0 : index
    %c0_10 = arith.constant 0 : index
    %12 = vector.load %arg5[%c0_9, %c0_10] : memref<1x128xf32, #tpu.memory_space<vmem>>, vector<1x128xf32>
    %13 = vector.broadcast %12 : vector<1x128xf32> to vector<16x128xf32>
    %14 = arith.addf %11, %13 : vector<16x128xf32>
    %cst_11 = arith.constant 0.000000e+00 : f32
    %15 = vector.broadcast %cst_11 : f32 to vector<16x128xf32>
    %16 = arith.maximumf %14, %15 : vector<16x128xf32>
    %17 = arith.truncf %16 : vector<16x128xf32> to vector<16x128xbf16>
    %c0_12 = arith.constant 0 : index
    %c0_13 = arith.constant 0 : index
    %18 = vector.load %arg6[%c0_12, %c0_13] : memref<128x4xbf16, #tpu.memory_space<vmem>>, vector<128x4xbf16>
    %cst_14 = arith.constant dense<0.000000e+00> : vector<16x4xf32>
    %19 = tpu.matmul %17, %18, %cst_14 {dimension_numbers = #tpu.dot_dimension_numbers<[1], [0], [0], [1], [0, 0, 1, 1], [], []>} : vector<16x128xbf16>, vector<128x4xbf16>, vector<16x4xf32> -> vector<16x4xf32>
    %c0_15 = arith.constant 0 : index
    %c0_16 = arith.constant 0 : index
    %20 = vector.load %arg7[%c0_15, %c0_16] : memref<1x4xf32, #tpu.memory_space<vmem>>, vector<1x4xf32>
    %21 = vector.broadcast %20 : vector<1x4xf32> to vector<16x4xf32>
    %22 = arith.addf %19, %21 : vector<16x4xf32>
    %c0_17 = arith.constant 0 : index
    %c0_18 = arith.constant 0 : index
    %23 = vector.load %arg8[%c0_17, %c0_18] : memref<16x4xf32, #tpu.memory_space<vmem>>, vector<16x4xf32>
    tpu.vector_store %arg8[%c0_17, %c0_18], %22 {strides = array<i32>} : memref<16x4xf32, #tpu.memory_space<vmem>>, vector<16x4xf32>,
    return
  }
  func.func @transform_0(%arg0: i32) -> (i32, i32) {
    %c0_i32 = arith.constant 0 : i32
    %c0_i32_0 = arith.constant 0 : i32
    return %arg0, %c0_i32 : i32, i32
  }
  func.func @transform_1(%arg0: i32) -> (i32, i32) {
    %c0_i32 = arith.constant 0 : i32
    %c0_i32_0 = arith.constant 0 : i32
    %c0_i32_1 = arith.constant 0 : i32
    return %c0_i32, %c0_i32_0 : i32, i32
  }
  func.func @transform_2(%arg0: i32) -> (i32, i32) {
    %c0_i32 = arith.constant 0 : i32
    %c0_i32_0 = arith.constant 0 : i32
    %c0_i32_1 = arith.constant 0 : i32
    return %c0_i32, %c0_i32_0 : i32, i32
  }
  func.func @transform_3(%arg0: i32) -> (i32, i32) {
    %c0_i32 = arith.constant 0 : i32
    %c0_i32_0 = arith.constant 0 : i32
    %c0_i32_1 = arith.constant 0 : i32
    return %c0_i32, %c0_i32_0 : i32, i32
  }
  func.func @transform_4(%arg0: i32) -> (i32, i32) {
    %c0_i32 = arith.constant 0 : i32
    %c0_i32_0 = arith.constant 0 : i32
    %c0_i32_1 = arith.constant 0 : i32
    return %c0_i32, %c0_i32_0 : i32, i32
  }
  func.func @transform_5(%arg0: i32) -> (i32, i32) {
    %c0_i32 = arith.constant 0 : i32
    %c0_i32_0 = arith.constant 0 : i32
    %c0_i32_1 = arith.constant 0 : i32
    return %c0_i32, %c0_i32_0 : i32, i32
  }
  func.func @transform_6(%arg0: i32) -> (i32, i32) {
    %c0_i32 = arith.constant 0 : i32
    %c0_i32_0 = arith.constant 0 : i32
    %c0_i32_1 = arith.constant 0 : i32
    return %c0_i32, %c0_i32_0 : i32, i32
  }
  func.func @transform_7(%arg0: i32) -> (i32, i32) {
    %c0_i32 = arith.constant 0 : i32
    %c0_i32_0 = arith.constant 0 : i32
    return %arg0, %c0_i32 : i32, i32
  }
}

module attributes {stable_mosaic.version = 11 : i64} {
  func.func @mlp_kernel(%arg0: i32, %arg1: memref<16x8xf32, #tpu.memory_space<vmem>>, %arg2: memref<8x128xbf16, #tpu.memory_space<vmem>>, %arg3: memref<1x128xf32, #tpu.memory_space<vmem>>, %arg4: memref<128x128xbf16, #tpu.memory_space<vmem>>, %arg5: memref<1x128xf32, #tpu.memory_space<vmem>>, %arg6: memref<128x4xbf16, #tpu.memory_space<vmem>>, %arg7: memref<1x4xf32, #tpu.memory_space<vmem>>, %arg8: memref<16x4xf32, #tpu.memory_space<vmem>>) attributes {dimension_semantics = [#tpu.dimension_semantics<parallel>], iteration_bounds = array<i64: 1>, scalar_prefetch = 0 : i64, scratch_operands = 0 : i64, tpu.core_type = #tpu.core_type<tc>, window_params = [{transform_indices = @transform_0, window_bounds = array<i64: 16, 8>}, {pipeline_mode = #tpu.pipeline_mode<synchronous>, transform_indices = @transform_1, window_bounds = array<i64: 8, 128>}, {pipeline_mode = #tpu.pipeline_mode<synchronous>, transform_indices = @transform_2, window_bounds = array<i64: 1, 128>}, {pipeline_mode = #tpu.pipeline_mode<synchronous>, transform_indices = @transform_3, window_bounds = array<i64: 128, 128>}, {pipeline_mode = #tpu.pipeline_mode<synchronous>, transform_indices = @transform_4, window_bounds = array<i64: 1, 128>}, {pipeline_mode = #tpu.pipeline_mode<synchronous>, transform_indices = @transform_5, window_bounds = array<i64: 128, 4>}, {pipeline_mode = #tpu.pipeline_mode<synchronous>, transform_indices = @transform_6, window_bounds = array<i64: 1, 4>}, {transform_indices = @transform_7, window_bounds = array<i64: 16, 4>}]} {
    %c0 = arith.constant 0 : index
    %c0_0 = arith.constant 0 : index
    %0 = vector.load %arg1[%c0, %c0_0] : memref<16x8xf32, #tpu.memory_space<vmem>>, vector<16x8xf32>
    %1 = arith.truncf %0 : vector<16x8xf32> to vector<16x8xbf16>
    %c0_1 = arith.constant 0 : index
    %c0_2 = arith.constant 0 : index
    %2 = vector.load %arg2[%c0_1, %c0_2] : memref<8x128xbf16, #tpu.memory_space<vmem>>, vector<8x128xbf16>
    %cst = arith.constant dense<0.000000e+00> : vector<16x128xf32>
    %3 = tpu.matmul %1, %2, %cst {dimension_numbers = #tpu.dot_dimension_numbers<[1], [0], [0], [1], [0, 0, 1, 1], [], []>} : vector<16x8xbf16>, vector<8x128xbf16>, vector<16x128xf32> -> vector<16x128xf32>
    %c0_3 = arith.constant 0 : index
    %c0_4 = arith.constant 0 : index
    %4 = vector.load %arg3[%c0_3, %c0_4] : memref<1x128xf32, #tpu.memory_space<vmem>>, vector<1x128xf32>
    %5 = vector.broadcast %4 : vector<1x128xf32> to vector<16x128xf32>
    %6 = arith.addf %3, %5 : vector<16x128xf32>
    %cst_5 = arith.constant 0.000000e+00 : f32
    %7 = vector.broadcast %cst_5 : f32 to vector<16x128xf32>
    %8 = arith.maximumf %6, %7 : vector<16x128xf32>
    %9 = arith.truncf %8 : vector<16x128xf32> to vector<16x128xbf16>
    %c0_6 = arith.constant 0 : index
    %c0_7 = arith.constant 0 : index
    %10 = vector.load %arg4[%c0_6, %c0_7] : memref<128x128xbf16, #tpu.memory_space<vmem>>, vector<128x128xbf16>
    %cst_8 = arith.constant dense<0.000000e+00> : vector<16x128xf32>
    %11 = tpu.matmul %9, %10, %cst_8 {dimension_numbers = #tpu.dot_dimension_numbers<[1], [0], [0], [1], [0, 0, 1, 1], [], []>} : vector<16x128xbf16>, vector<128x128xbf16>, vector<16x128xf32> -> vector<16x128xf32>
    %c0_9 = arith.constant 0 : index
    %c0_10 = arith.constant 0 : index
    %12 = vector.load %arg5[%c0_9, %c0_10] : memref<1x128xf32, #tpu.memory_space<vmem>>, vector<1x128xf32>
    %13 = vector.broadcast %12 : vector<1x128xf32> to vector<16x128xf32>
    %14 = arith.addf %11, %13 : vector<16x128xf32>
    %cst_11 = arith.constant 0.000000e+00 : f32
    %15 = vector.broadcast %cst_11 : f32 to vector<16x128xf32>
    %16 = arith.maximumf %14, %15 : vector<16x128xf32>
    %17 = arith.truncf %16 : vector<16x128xf32> to vector<16x128xbf16>
    %c0_12 = arith.constant 0 : index
    %c0_13 = arith.constant 0 : index
    %18 = vector.load %arg6[%c0_12, %c0_13] : memref<128x4xbf16, #tpu.memory_space<vmem>>, vector<128x4xbf16>
    %cst_14 = arith.constant dense<0.000000e+00> : vector<16x4xf32>
    %19 = tpu.matmul %17, %18, %cst_14 {dimension_numbers = #tpu.dot_dimension_numbers<[1], [0], [0], [1], [0, 0, 1, 1], [], []>} : vector<16x128xbf16>, vector<128x4xbf16>, vector<16x4xf32> -> vector<16x4xf32>
    %c0_15 = arith.constant 0 : index
    %c0_16 = arith.constant 0 : index
    %20 = vector.load %arg7[%c0_15, %c0_16] : memref<1x4xf32, #tpu.memory_space<vmem>>, vector<1x4xf32>
    %21 = vector.broadcast %20 : vector<1x4xf32> to vector<16x4xf32>
    %22 = arith.addf %19, %21 : vector<16x4xf32>
    %c0_17 = arith.constant 0 : index
    %c0_18 = arith.constant 0 : index
    %23 = vector.load %arg8[%c0_17, %c0_18] : memref<16x4xf32, #tpu.memory_space<vmem>>, vector<16x4xf32>
    tpu.vector_store %arg8[%c0_17, %c0_18], %22 {strides = array<i32>} : memref<16x4xf32, #tpu.memory_space<vmem>>, vector<16x4xf32>,
    return
  }
  func.func @transform_0(%arg0: i32) -> (i32, i32) {
    %c0_i32 = arith.constant 0 : i32
    %c0_i32_0 = arith.constant 0 : i32
    return %arg0, %c0_i32 : i32, i32
  }
  func.func @transform_1(%arg0: i32) -> (i32, i32) {
    %c0_i32 = arith.constant 0 : i32
    %c0_i32_0 = arith.constant 0 : i32
    %c0_i32_1 = arith.constant 0 : i32
    return %c0_i32, %c0_i32_0 : i32, i32
  }
  func.func @transform_2(%arg0: i32) -> (i32, i32) {
    %c0_i32 = arith.constant 0 : i32
    %c0_i32_0 = arith.constant 0 : i32
    %c0_i32_1 = arith.constant 0 : i32
    return %c0_i32, %c0_i32_0 : i32, i32
  }
  func.func @transform_3(%arg0: i32) -> (i32, i32) {
    %c0_i32 = arith.constant 0 : i32
    %c0_i32_0 = arith.constant 0 : i32
    %c0_i32_1 = arith.constant 0 : i32
    return %c0_i32, %c0_i32_0 : i32, i32
  }
  func.func @transform_4(%arg0: i32) -> (i32, i32) {
    %c0_i32 = arith.constant 0 : i32
    %c0_i32_0 = arith.constant 0 : i32
    %c0_i32_1 = arith.constant 0 : i32
    return %c0_i32, %c0_i32_0 : i32, i32
  }
  func.func @transform_5(%arg0: i32) -> (i32, i32) {
    %c0_i32 = arith.constant 0 : i32
    %c0_i32_0 = arith.constant 0 : i32
    %c0_i32_1 = arith.constant 0 : i32
    return %c0_i32, %c0_i32_0 : i32, i32
  }
  func.func @transform_6(%arg0: i32) -> (i32, i32) {
    %c0_i32 = arith.constant 0 : i32
    %c0_i32_0 = arith.constant 0 : i32
    %c0_i32_1 = arith.constant 0 : i32
    return %c0_i32, %c0_i32_0 : i32, i32
  }
  func.func @transform_7(%arg0: i32) -> (i32, i32) {
    %c0_i32 = arith.constant 0 : i32
    %c0_i32_0 = arith.constant 0 : i32
    return %arg0, %c0_i32 : i32, i32
  }
}

</mosaic_0001>

<llo_original>
// kernel: tpu_custom_call.1
$region0: #{tpu_custom_call.1}
  #allocation0 [shape = 'u32[]', space=smem, size = 0x4, offset = 0x4, fixed_abs, tag = 'smem constant byte address 0x4 - core index']
  #allocation1 [shape = 'u32[72,128]{1,0:T(1,128)}', space=vmem, size = 0x9000, scoped, tag = 'internal scratch']
  %s0 = inlined_call_operand.vmem [shape: f32[16,8], index: 0, kind: input, shape index: {}]
  %s1 = inlined_call_operand.vmem [shape: bf16[8,128], index: 1, kind: input, shape index: {}]
  %s2 = inlined_call_operand.vmem [shape: f32[1,128], index: 2, kind: input, shape index: {}]
  %s3 = inlined_call_operand.vmem [shape: bf16[128,128], index: 3, kind: input, shape index: {}]
  %s4 = inlined_call_operand.vmem [shape: f32[1,128], index: 4, kind: input, shape index: {}]
  %s5 = inlined_call_operand.vmem [shape: bf16[128,4], index: 5, kind: input, shape index: {}]
  %s6 = inlined_call_operand.vmem [shape: f32[1,4], index: 6, kind: input, shape index: {}]
  %s7 = inlined_call_operand.vmem [shape: f32[16,4], index: 7, kind: output, shape index: {}]
  %s8 = sld [smem:[#allocation0]]
  $region38: #{tpu_custom_call.1} parent=0
    _
  %s10 = ssub.s32 1, %s8
  %s11 = scalar_select 0, %s10, %s8
  // Predicated region
  $region2: #{tpu_custom_call.1} parent=0 // pred_check
    _
  $region3: #{tpu_custom_call.1} parent=0 // pred_check_branch
    %13 = sbr.rel (0) target = $region5
  $region4: #{tpu_custom_call.1} parent=0 // pred_region
    _
  $region5: #{tpu_custom_call.1} parent=0 // pred_fallthru
    _
  // Predicated region
  $region6: #{tpu_custom_call.1} parent=0 // pred_check
    _
  $region7: #{tpu_custom_call.1} parent=0 // pred_check_branch
    %15 = sbr.rel (0) target = $region9
  $region8: #{tpu_custom_call.1} parent=0 // pred_region
    _
  $region9: #{tpu_custom_call.1} parent=0 // pred_fallthru
    _
  // Predicated region
  $region10: #{tpu_custom_call.1} parent=0 // pred_check
    _
  $region11: #{tpu_custom_call.1} parent=0 // pred_check_branch
    %17 = sbr.rel (0) target = $region13
  $region12: #{tpu_custom_call.1} parent=0 // pred_region
    _
  $region13: #{tpu_custom_call.1} parent=0 // pred_fallthru
    _
  // Predicated region
  $region14: #{tpu_custom_call.1} parent=0 // pred_check
    _
  $region15: #{tpu_custom_call.1} parent=0 // pred_check_branch
    %19 = sbr.rel (0) target = $region17
  $region16: #{tpu_custom_call.1} parent=0 // pred_region
    _
  $region17: #{tpu_custom_call.1} parent=0 // pred_fallthru
    _
  // Predicated region
  $region18: #{tpu_custom_call.1} parent=0 // pred_check
    _
  $region19: #{tpu_custom_call.1} parent=0 // pred_check_branch
    %21 = sbr.rel (0) target = $region21
  $region20: #{tpu_custom_call.1} parent=0 // pred_region
    _
  $region21: #{tpu_custom_call.1} parent=0 // pred_fallthru
    _
  // Predicated region
  $region22: #{tpu_custom_call.1} parent=0 // pred_check
    _
  $region23: #{tpu_custom_call.1} parent=0 // pred_check_branch
    %23 = sbr.rel (0) target = $region25
  $region24: #{tpu_custom_call.1} parent=0 // pred_region
    _
  $region25: #{tpu_custom_call.1} parent=0 // pred_fallthru
    _
  // Predicated region
  $region26: #{tpu_custom_call.1} parent=0 // pred_check
    _
  $region27: #{tpu_custom_call.1} parent=0 // pred_check_branch
    %25 = sbr.rel (0) target = $region29
  $region28: #{tpu_custom_call.1} parent=0 // pred_region
    _
  $region29: #{tpu_custom_call.1} parent=0 // pred_fallthru
    _
  %v27 = vld [vmem:[%s0] sm:$0xff]
  %v28 = vld [vmem:[%s0 + $0x8] sm:$0xff]
  %v29 = vpack.c.bf16 %v28, %v27
  %v30 = vld [vmem:[%s1] sm:$0xf]
  %v31 = vld [vmem:[%s2] sm:$0x1]
  %v33 = vperm.slane %v31, 0
  %vm35 = vcmask 64512
  %v37 = vsel %vm35, %v29, 0
  %vm39 = vcmask 1043456
  %v41 = vsel %vm39, %v30, 0
  %43 = vmatpush.bf16.msra.mxu0 0
  %44 = vmatpush.bf16.msra.mxu0 0
  %45 = vmatpush.bf16.msra.mxu0 0
  %46 = vmatpush.bf16.msra.mxu0 0
  %47 = vmatpush.bf16.msra.mxu0 0
  %48 = vmatpush.bf16.msra.mxu0 0
  %49 = vmatpush.bf16.msra.mxu0 0
  %50 = vmatpush.bf16.msra.mxu0 %v41
  %51 = vmatmul.bf16.gmra.mxu0 %v37
  %v52 = vpop.f32.mrf.mxu0
  %v53 = vadd.f32 %v33, %v52
  %v54 = vpop.f32.mrf.mxu0
  %v55 = vadd.f32 %v33, %v54
  %56 = vdwg.mxu0
  %v57 = vmax.f32 %v53, 0.0
  %v58 = vmax.f32 %v55, 0.0
  %v59 = vpack.c.bf16 %v58, %v57
  %v60 = vld [vmem:[%s3] sm:$0xf]
  %v61 = vld [vmem:[%s3 + $0x4] sm:$0xf]
  %v62 = vld [vmem:[%s3 + $0x8] sm:$0xf]
  %v63 = vld [vmem:[%s3 + $0xc] sm:$0xf]
  %v64 = vld [vmem:[%s3 + $0x10] sm:$0xf]
  %v65 = vld [vmem:[%s3 + $0x14] sm:$0xf]
  %v66 = vld [vmem:[%s3 + $0x18] sm:$0xf]
  %v67 = vld [vmem:[%s3 + $0x1c] sm:$0xf]
  %v68 = vld [vmem:[%s3 + $0x20] sm:$0xf]
  %v69 = vld [vmem:[%s3 + $0x24] sm:$0xf]
  %v70 = vld [vmem:[%s3 + $0x28] sm:$0xf]
  %v71 = vld [vmem:[%s3 + $0x2c] sm:$0xf]
  %v72 = vld [vmem:[%s3 + $0x30] sm:$0xf]
  %v73 = vld [vmem:[%s3 + $0x34] sm:$0xf]
  %v74 = vld [vmem:[%s3 + $0x38] sm:$0xf]
  %v75 = vld [vmem:[%s3 + $0x3c] sm:$0xf]
  %v76 = vld [vmem:[%s4] sm:$0x1]
  %v78 = vperm.slane %v76, 0
  %v96 = vunpack.c.l.b16 %v60
  %v97 = vunpack.c.l.b16 %v61
  %v98 = vunpack.c.l.b16 %v62
  %v99 = vunpack.c.l.b16 %v63
  %v100 = vunpack.c.l.b16 %v64
  %v101 = vunpack.c.l.b16 %v65
  %v102 = vunpack.c.l.b16 %v66
  %v103 = vunpack.c.l.b16 %v67
  %v104 = vunpack.c.l.b16 %v68
  %v105 = vunpack.c.l.b16 %v69
  %v106 = vunpack.c.l.b16 %v70
  %v107 = vunpack.c.l.b16 %v71
  %v108 = vunpack.c.l.b16 %v72
  %v109 = vunpack.c.l.b16 %v73
  %v110 = vunpack.c.l.b16 %v74
  %v111 = vunpack.c.l.b16 %v75
  %v112 = vpack.c.b16 %v97, %v96
  %v113 = vpack.c.b16 %v99, %v98
  %v114 = vpack.c.b16 %v101, %v100
  %v115 = vpack.c.b16 %v103, %v102
  %v116 = vpack.c.b16 %v105, %v104
  %v117 = vpack.c.b16 %v107, %v106
  %v118 = vpack.c.b16 %v109, %v108
  %v119 = vpack.c.b16 %v111, %v110
  %128 = vmatpush.bf16.msra.mxu0 %v119
  %129 = vmatpush.bf16.msra.mxu0 %v118
  %130 = vmatpush.bf16.msra.mxu0 %v117
  %131 = vmatpush.bf16.msra.mxu0 %v116
  %132 = vmatpush.bf16.msra.mxu0 %v115
  %133 = vmatpush.bf16.msra.mxu0 %v114
  %134 = vmatpush.bf16.msra.mxu0 %v113
  %135 = vmatpush.bf16.msra.mxu0 %v112
  %136 = vmatmul.bf16.gmra.mxu0 %v59
  %v137 = vpop.f32.mrf.mxu0
  %v138 = vadd.f32 %v78, %v137
  %v139 = vpop.f32.mrf.mxu0
  %v140 = vadd.f32 %v78, %v139
  %141 = vdwg.mxu0
  %v142 = vmax.f32 %v138, 0.0
  %v143 = vmax.f32 %v140, 0.0
  %v144 = vpack.c.bf16 %v143, %v142
  %v145 = vld [vmem:[%s5] sm:$0xf]
  %v146 = vld [vmem:[%s5 + $0x4] sm:$0xf]
  %v147 = vld [vmem:[%s5 + $0x8] sm:$0xf]
  %v148 = vld [vmem:[%s5 + $0xc] sm:$0xf]
  %v149 = vld [vmem:[%s5 + $0x10] sm:$0xf]
  %v150 = vld [vmem:[%s5 + $0x14] sm:$0xf]
  %v151 = vld [vmem:[%s5 + $0x18] sm:$0xf]
  %v152 = vld [vmem:[%s5 + $0x1c] sm:$0xf]
  %v153 = vld [vmem:[%s5 + $0x20] sm:$0xf]
  %v154 = vld [vmem:[%s5 + $0x24] sm:$0xf]
  %v155 = vld [vmem:[%s5 + $0x28] sm:$0xf]
  %v156 = vld [vmem:[%s5 + $0x2c] sm:$0xf]
  %v157 = vld [vmem:[%s5 + $0x30] sm:$0xf]
  %v158 = vld [vmem:[%s5 + $0x34] sm:$0xf]
  %v159 = vld [vmem:[%s5 + $0x38] sm:$0xf]
  %v160 = vld [vmem:[%s5 + $0x3c] sm:$0xf]
  %v161 = vld [vmem:[%s6] sm:$0x1]
  %v163 = vperm.slane %v161, 0
  %v181 = vunpack.c.l.b16 %v145
  %v182 = vunpack.c.l.b16 %v146
  %v183 = vunpack.c.l.b16 %v147
  %v184 = vunpack.c.l.b16 %v148
  %v185 = vunpack.c.l.b16 %v149
  %v186 = vunpack.c.l.b16 %v150
  %v187 = vunpack.c.l.b16 %v151
  %v188 = vunpack.c.l.b16 %v152
  %v189 = vunpack.c.l.b16 %v153
  %v190 = vunpack.c.l.b16 %v154
  %v191 = vunpack.c.l.b16 %v155
  %v192 = vunpack.c.l.b16 %v156
  %v193 = vunpack.c.l.b16 %v157
  %v194 = vunpack.c.l.b16 %v158
  %v195 = vunpack.c.l.b16 %v159
  %v196 = vunpack.c.l.b16 %v160
  %v197 = vpack.c.b16 %v182, %v181
  %v198 = vpack.c.b16 %v184, %v183
  %v199 = vpack.c.b16 %v186, %v185
  %v200 = vpack.c.b16 %v188, %v187
  %v201 = vpack.c.b16 %v190, %v189
  %v202 = vpack.c.b16 %v192, %v191
  %v203 = vpack.c.b16 %v194, %v193
  %v204 = vpack.c.b16 %v196, %v195
  %213 = vmatpush.bf16.msra.mxu0 %v204
  %214 = vmatpush.bf16.msra.mxu0 %v203
  %215 = vmatpush.bf16.msra.mxu0 %v202
  %216 = vmatpush.bf16.msra.mxu0 %v201
  %217 = vmatpush.bf16.msra.mxu0 %v200
  %218 = vmatpush.bf16.msra.mxu0 %v199
  %219 = vmatpush.bf16.msra.mxu0 %v198
  %220 = vmatpush.bf16.msra.mxu0 %v197
  %221 = vmatmul.bf16.gmra.mxu0 %v144
  %v222 = vpop.f32.mrf.mxu0
  %v223 = vadd.f32 %v163, %v222
  %v224 = vpop.f32.mrf.mxu0
  %v225 = vadd.f32 %v163, %v224
  %226 = vdwg.mxu0
  %vm227 = vcmask 31744
  %228 = vst.msk [vmem:[%s7] sm:$0xff] %vm227, %v223
  %229 = vst.msk [vmem:[%s7 + $0x8] sm:$0xff] %vm227, %v225
  // Predicated region
  $region30: #{tpu_custom_call.1} parent=0 // pred_check
    _
  $region31: #{tpu_custom_call.1} parent=0 // pred_check_branch
    %231 = sbr.rel (0) target = $region33
  $region32: #{tpu_custom_call.1} parent=0 // pred_region
    _
  $region33: #{tpu_custom_call.1} parent=0 // pred_fallthru
    _
  // Predicated region
  $region34: #{tpu_custom_call.1} parent=0 // pred_check
    _
  $region35: #{tpu_custom_call.1} parent=0 // pred_check_branch
    %233 = sbr.rel (0) target = $region37
  $region36: #{tpu_custom_call.1} parent=0 // pred_region
    _
  $region37: #{tpu_custom_call.1} parent=0 // pred_fallthru
    _

// kernel: tpu_custom_call.1
$region0: #{tpu_custom_call.1}
  #allocation0 [shape = 'u32[]', space=smem, size = 0x4, offset = 0x4, fixed_abs, tag = 'smem constant byte address 0x4 - core index']
  #allocation1 [shape = 'u32[72,128]{1,0:T(1,128)}', space=vmem, size = 0x9000, scoped, tag = 'internal scratch']
  %s0 = inlined_call_operand.vmem [shape: f32[16,8], index: 0, kind: input, shape index: {}]
  %s1 = inlined_call_operand.vmem [shape: bf16[8,128], index: 1, kind: input, shape index: {}]
  %s2 = inlined_call_operand.vmem [shape: f32[1,128], index: 2, kind: input, shape index: {}]
  %s3 = inlined_call_operand.vmem [shape: bf16[128,128], index: 3, kind: input, shape index: {}]
  %s4 = inlined_call_operand.vmem [shape: f32[1,128], index: 4, kind: input, shape index: {}]
  %s5 = inlined_call_operand.vmem [shape: bf16[128,4], index: 5, kind: input, shape index: {}]
  %s6 = inlined_call_operand.vmem [shape: f32[1,4], index: 6, kind: input, shape index: {}]
  %s7 = inlined_call_operand.vmem [shape: f32[16,4], index: 7, kind: output, shape index: {}]
  %s8 = sld [smem:[#allocation0]]
  $region38: #{tpu_custom_call.1} parent=0
    _
  %s10 = ssub.s32 1, %s8
  %s11 = scalar_select 0, %s10, %s8
  // Predicated region
  $region2: #{tpu_custom_call.1} parent=0 // pred_check
    _
  $region3: #{tpu_custom_call.1} parent=0 // pred_check_branch
    %13 = sbr.rel (0) target = $region5
  $region4: #{tpu_custom_call.1} parent=0 // pred_region
    _
  $region5: #{tpu_custom_call.1} parent=0 // pred_fallthru
    _
  // Predicated region
  $region6: #{tpu_custom_call.1} parent=0 // pred_check
    _
  $region7: #{tpu_custom_call.1} parent=0 // pred_check_branch
    %15 = sbr.rel (0) target = $region9
  $region8: #{tpu_custom_call.1} parent=0 // pred_region
    _
  $region9: #{tpu_custom_call.1} parent=0 // pred_fallthru
    _
  // Predicated region
  $region10: #{tpu_custom_call.1} parent=0 // pred_check
    _
  $region11: #{tpu_custom_call.1} parent=0 // pred_check_branch
    %17 = sbr.rel (0) target = $region13
  $region12: #{tpu_custom_call.1} parent=0 // pred_region
    _
  $region13: #{tpu_custom_call.1} parent=0 // pred_fallthru
    _
  // Predicated region
  $region14: #{tpu_custom_call.1} parent=0 // pred_check
    _
  $region15: #{tpu_custom_call.1} parent=0 // pred_check_branch
    %19 = sbr.rel (0) target = $region17
  $region16: #{tpu_custom_call.1} parent=0 // pred_region
    _
  $region17: #{tpu_custom_call.1} parent=0 // pred_fallthru
    _
  // Predicated region
  $region18: #{tpu_custom_call.1} parent=0 // pred_check
    _
  $region19: #{tpu_custom_call.1} parent=0 // pred_check_branch
    %21 = sbr.rel (0) target = $region21
  $region20: #{tpu_custom_call.1} parent=0 // pred_region
    _
  $region21: #{tpu_custom_call.1} parent=0 // pred_fallthru
    _
  // Predicated region
  $region22: #{tpu_custom_call.1} parent=0 // pred_check
    _
  $region23: #{tpu_custom_call.1} parent=0 // pred_check_branch
    %23 = sbr.rel (0) target = $region25
  $region24: #{tpu_custom_call.1} parent=0 // pred_region
    _
  $region25: #{tpu_custom_call.1} parent=0 // pred_fallthru
    _
  // Predicated region
  $region26: #{tpu_custom_call.1} parent=0 // pred_check
    _
  $region27: #{tpu_custom_call.1} parent=0 // pred_check_branch
    %25 = sbr.rel (0) target = $region29
  $region28: #{tpu_custom_call.1} parent=0 // pred_region
    _
  $region29: #{tpu_custom_call.1} parent=0 // pred_fallthru
    _
  %v27 = vld [vmem:[%s0] sm:$0xff]
  %v28 = vld [vmem:[%s0 + $0x8] sm:$0xff]
  %v29 = vpack.c.bf16 %v28, %v27
  %v30 = vld [vmem:[%s1] sm:$0xf]
  %v31 = vld [vmem:[%s2] sm:$0x1]
  %v33 = vperm.slane %v31, 0
  %vm35 = vcmask 64512
  %v37 = vsel %vm35, %v29, 0
  %vm39 = vcmask 1043456
  %v41 = vsel %vm39, %v30, 0
  %43 = vmatpush.bf16.msra.mxu0 0
  %44 = vmatpush.bf16.msra.mxu0 0
  %45 = vmatpush.bf16.msra.mxu0 0
  %46 = vmatpush.bf16.msra.mxu0 0
  %47 = vmatpush.bf16.msra.mxu0 0
  %48 = vmatpush.bf16.msra.mxu0 0
  %49 = vmatpush.bf16.msra.mxu0 0
  %50 = vmatpush.bf16.msra.mxu0 %v41
  %51 = vmatmul.bf16.gmra.mxu0 %v37
  %v52 = vpop.f32.mrf.mxu0
  %v53 = vadd.f32 %v33, %v52
  %v54 = vpop.f32.mrf.mxu0
  %v55 = vadd.f32 %v33, %v54
  %56 = vdwg.mxu0
  %v57 = vmax.f32 %v53, 0.0
  %v58 = vmax.f32 %v55, 0.0
  %v59 = vpack.c.bf16 %v58, %v57
  %v60 = vld [vmem:[%s3] sm:$0xf]
  %v61 = vld [vmem:[%s3 + $0x4] sm:$0xf]
  %v62 = vld [vmem:[%s3 + $0x8] sm:$0xf]
  %v63 = vld [vmem:[%s3 + $0xc] sm:$0xf]
  %v64 = vld [vmem:[%s3 + $0x10] sm:$0xf]
  %v65 = vld [vmem:[%s3 + $0x14] sm:$0xf]
  %v66 = vld [vmem:[%s3 + $0x18] sm:$0xf]
  %v67 = vld [vmem:[%s3 + $0x1c] sm:$0xf]
  %v68 = vld [vmem:[%s3 + $0x20] sm:$0xf]
  %v69 = vld [vmem:[%s3 + $0x24] sm:$0xf]
  %v70 = vld [vmem:[%s3 + $0x28] sm:$0xf]
  %v71 = vld [vmem:[%s3 + $0x2c] sm:$0xf]
  %v72 = vld [vmem:[%s3 + $0x30] sm:$0xf]
  %v73 = vld [vmem:[%s3 + $0x34] sm:$0xf]
  %v74 = vld [vmem:[%s3 + $0x38] sm:$0xf]
  %v75 = vld [vmem:[%s3 + $0x3c] sm:$0xf]
  %v76 = vld [vmem:[%s4] sm:$0x1]
  %v78 = vperm.slane %v76, 0
  %v96 = vunpack.c.l.b16 %v60
  %v97 = vunpack.c.l.b16 %v61
  %v98 = vunpack.c.l.b16 %v62
  %v99 = vunpack.c.l.b16 %v63
  %v100 = vunpack.c.l.b16 %v64
  %v101 = vunpack.c.l.b16 %v65
  %v102 = vunpack.c.l.b16 %v66
  %v103 = vunpack.c.l.b16 %v67
  %v104 = vunpack.c.l.b16 %v68
  %v105 = vunpack.c.l.b16 %v69
  %v106 = vunpack.c.l.b16 %v70
  %v107 = vunpack.c.l.b16 %v71
  %v108 = vunpack.c.l.b16 %v72
  %v109 = vunpack.c.l.b16 %v73
  %v110 = vunpack.c.l.b16 %v74
  %v111 = vunpack.c.l.b16 %v75
  %v112 = vpack.c.b16 %v97, %v96
  %v113 = vpack.c.b16 %v99, %v98
  %v114 = vpack.c.b16 %v101, %v100
  %v115 = vpack.c.b16 %v103, %v102
  %v116 = vpack.c.b16 %v105, %v104
  %v117 = vpack.c.b16 %v107, %v106
  %v118 = vpack.c.b16 %v109, %v108
  %v119 = vpack.c.b16 %v111, %v110
  %128 = vmatpush.bf16.msra.mxu0 %v119
  %129 = vmatpush.bf16.msra.mxu0 %v118
  %130 = vmatpush.bf16.msra.mxu0 %v117
  %131 = vmatpush.bf16.msra.mxu0 %v116
  %132 = vmatpush.bf16.msra.mxu0 %v115
  %133 = vmatpush.bf16.msra.mxu0 %v114
  %134 = vmatpush.bf16.msra.mxu0 %v113
  %135 = vmatpush.bf16.msra.mxu0 %v112
  %136 = vmatmul.bf16.gmra.mxu0 %v59
  %v137 = vpop.f32.mrf.mxu0
  %v138 = vadd.f32 %v78, %v137
  %v139 = vpop.f32.mrf.mxu0
  %v140 = vadd.f32 %v78, %v139
  %141 = vdwg.mxu0
  %v142 = vmax.f32 %v138, 0.0
  %v143 = vmax.f32 %v140, 0.0
  %v144 = vpack.c.bf16 %v143, %v142
  %v145 = vld [vmem:[%s5] sm:$0xf]
  %v146 = vld [vmem:[%s5 + $0x4] sm:$0xf]
  %v147 = vld [vmem:[%s5 + $0x8] sm:$0xf]
  %v148 = vld [vmem:[%s5 + $0xc] sm:$0xf]
  %v149 = vld [vmem:[%s5 + $0x10] sm:$0xf]
  %v150 = vld [vmem:[%s5 + $0x14] sm:$0xf]
  %v151 = vld [vmem:[%s5 + $0x18] sm:$0xf]
  %v152 = vld [vmem:[%s5 + $0x1c] sm:$0xf]
  %v153 = vld [vmem:[%s5 + $0x20] sm:$0xf]
  %v154 = vld [vmem:[%s5 + $0x24] sm:$0xf]
  %v155 = vld [vmem:[%s5 + $0x28] sm:$0xf]
  %v156 = vld [vmem:[%s5 + $0x2c] sm:$0xf]
  %v157 = vld [vmem:[%s5 + $0x30] sm:$0xf]
  %v158 = vld [vmem:[%s5 + $0x34] sm:$0xf]
  %v159 = vld [vmem:[%s5 + $0x38] sm:$0xf]
  %v160 = vld [vmem:[%s5 + $0x3c] sm:$0xf]
  %v161 = vld [vmem:[%s6] sm:$0x1]
  %v163 = vperm.slane %v161, 0
  %v181 = vunpack.c.l.b16 %v145
  %v182 = vunpack.c.l.b16 %v146
  %v183 = vunpack.c.l.b16 %v147
  %v184 = vunpack.c.l.b16 %v148
  %v185 = vunpack.c.l.b16 %v149
  %v186 = vunpack.c.l.b16 %v150
  %v187 = vunpack.c.l.b16 %v151
  %v188 = vunpack.c.l.b16 %v152
  %v189 = vunpack.c.l.b16 %v153
  %v190 = vunpack.c.l.b16 %v154
  %v191 = vunpack.c.l.b16 %v155
  %v192 = vunpack.c.l.b16 %v156
  %v193 = vunpack.c.l.b16 %v157
  %v194 = vunpack.c.l.b16 %v158
  %v195 = vunpack.c.l.b16 %v159
  %v196 = vunpack.c.l.b16 %v160
  %v197 = vpack.c.b16 %v182, %v181
  %v198 = vpack.c.b16 %v184, %v183
  %v199 = vpack.c.b16 %v186, %v185
  %v200 = vpack.c.b16 %v188, %v187
  %v201 = vpack.c.b16 %v190, %v189
  %v202 = vpack.c.b16 %v192, %v191
  %v203 = vpack.c.b16 %v194, %v193
  %v204 = vpack.c.b16 %v196, %v195
  %213 = vmatpush.bf16.msra.mxu0 %v204
  %214 = vmatpush.bf16.msra.mxu0 %v203
  %215 = vmatpush.bf16.msra.mxu0 %v202
  %216 = vmatpush.bf16.msra.mxu0 %v201
  %217 = vmatpush.bf16.msra.mxu0 %v200
  %218 = vmatpush.bf16.msra.mxu0 %v199
  %219 = vmatpush.bf16.msra.mxu0 %v198
  %220 = vmatpush.bf16.msra.mxu0 %v197
  %221 = vmatmul.bf16.gmra.mxu0 %v144
  %v222 = vpop.f32.mrf.mxu0
  %v223 = vadd.f32 %v163, %v222
  %v224 = vpop.f32.mrf.mxu0
  %v225 = vadd.f32 %v163, %v224
  %226 = vdwg.mxu0
  %vm227 = vcmask 31744
  %228 = vst.msk [vmem:[%s7] sm:$0xff] %vm227, %v223
  %229 = vst.msk [vmem:[%s7 + $0x8] sm:$0xff] %vm227, %v225
  // Predicated region
  $region30: #{tpu_custom_call.1} parent=0 // pred_check
    _
  $region31: #{tpu_custom_call.1} parent=0 // pred_check_branch
    %231 = sbr.rel (0) target = $region33
  $region32: #{tpu_custom_call.1} parent=0 // pred_region
    _
  $region33: #{tpu_custom_call.1} parent=0 // pred_fallthru
    _
  // Predicated region
  $region34: #{tpu_custom_call.1} parent=0 // pred_check
    _
  $region35: #{tpu_custom_call.1} parent=0 // pred_check_branch
    %233 = sbr.rel (0) target = $region37
  $region36: #{tpu_custom_call.1} parent=0 // pred_region
    _
  $region37: #{tpu_custom_call.1} parent=0 // pred_fallthru
    _

</llo_original>
